<compile_context>
chip_gen: v7x
topology: tpu7x:2x2x1
jax: 0.10.0
libtpu: 0.0.40
codegen_flags: <defaults>
</compile_context>

<pallas_src>
import math

import numpy as np
import jax
import jax.numpy as jnp
from jax.experimental import pallas as pl
from jax.experimental.pallas import tpu as pltpu


def _hadamard(sz: int) -> np.ndarray:
    """Sylvester-construction Hadamard matrix (entries +/-1), sz a power of 2."""
    H = np.array([[1.0]], dtype=np.float32)
    while H.shape[0] < sz:
        H = np.block([[H, H], [H, -H]])
    return H


def _round_up(n: int, m: int) -> int:
    return ((n + m - 1) // m) * m


def _round_down(n: int, m: int) -> int:
    return (n // m) * m


def _vmem_capacity_bytes() -> int:
    """Physical VMEM per TensorCore; conservative fallback if query fails."""
    try:
        return int(pltpu.get_tpu_info().vmem_capacity_bytes)
    except Exception:
        return 64 * 1024 * 1024  # v7x per-TC VMEM (smallest of the three gens)


def _make_kernel(scale_output_side: bool):
    def kernel(x_ref, w_ref, bias_ref, scale_ref, o_ref):
        # x_ref:     (TB, In)  VMEM, caller dtype
        # w_ref:     (In, TN)  VMEM, bf16, pre-transposed +/-1 Hadamard slice
        # bias_ref:  (1,  TN)  VMEM, f32
        # scale_ref: (1,)      SMEM, f32 scalar
        # o_ref:     (TB, TN)  VMEM, caller dtype
        x = x_ref[...].astype(jnp.float32)
        # L2 norm along last dim (+ eps) — matches x.norm(2, -1, keepdim=True).
        ssq = jnp.sum(x * x, axis=-1, keepdims=True)                # XLU reduce
        inv = pl.reciprocal(jnp.sqrt(ssq) + 1e-8, approx=True)      # EUP slot
        row_scale = inv * (-scale_ref[0])                           # (TB, 1)
        if scale_output_side:
            # Row scaling commutes with the matmul: scale the narrower side.
            out = jnp.dot(x.astype(jnp.bfloat16), w_ref[...],
                          preferred_element_type=jnp.float32)       # MXU
            out = out * row_scale
        else:
            xn = (x * row_scale).astype(jnp.bfloat16)
            out = jnp.dot(xn, w_ref[...],
                          preferred_element_type=jnp.float32)       # MXU
        # Single fused add + cast + store epilogue.
        o_ref[...] = (out + bias_ref[...]).astype(o_ref.dtype)

    return kernel


def hadamard_proj(x, w, scale, bias=None, *, max_block_b=1024):
    """x: (B, In); w: (Out, In) +/-1 Hadamard slice; scale: (1,); bias: (Out,)."""
    B, In = x.shape
    Out, In_w = w.shape
    assert In_w == In
    out_dtype = x.dtype                      # bf16 caller -> bf16 HBM I/O
    x_bytes = x.dtype.itemsize
    o_bytes = x_bytes

    # Constant projection, pre-transposed to (In, Out) bf16 (one-time prep of a
    # weight; +/-1 entries are exact in bf16). Bias/scale prepped to f32.
    w_t = jnp.asarray(w).T.astype(jnp.bfloat16)
    if bias is None:
        bias = jnp.zeros((Out,), jnp.float32)
    bias2d = jnp.asarray(bias).reshape(1, Out).astype(jnp.float32)
    scale = jnp.asarray(scale).reshape((1,)).astype(jnp.float32)

    # ---- generation-aware VMEM budgeting ------------------------------------
    vmem_cap = _vmem_capacity_bytes()        # 64 MiB (v7x) / 128 MiB (v5e/v6e)
    vmem_budget = vmem_cap // 2

    # Out (N) tiling: keep W fully VMEM-resident when it is small enough,
    # otherwise stream (In, tn) slabs with tn a multiple of 256 (full MXU width
    # on v6e/v7x). Power-of-2 Hadamard sizes always satisfy the divisibility.
    w_bytes_full = In * Out * 2
    w_budget = vmem_budget // 4
    if w_bytes_full > w_budget and Out % 128 == 0:
        tn = 256 if Out % 256 == 0 else 128
        while Out % (tn * 2) == 0 and In * (tn * 2) * 2 <= w_budget:
            tn *= 2
    else:
        tn = Out
    n_steps = pl.cdiv(Out, tn)
    w_resident = (1 if n_steps == 1 else 2) * In * tn * 2   # 1 buf when resident

    # Batch tile: largest multiple of 8 whose double-buffered x/out (+ f32
    # temps) fit the budget, capped at 1024 rows; force >= 2 steps so both v7x
    # TensorCores get work (v5e/v6e have 1 TC and are unaffected).
    if B <= 8:
        tb = B                                # full-dim block, exempt from 8-row rule
    else:
        per_row = 2 * In * x_bytes + 2 * tn * o_bytes + 4 * (In + tn)
        avail = max(vmem_budget - w_resident, 8 * per_row)
        tb = _round_down(int(avail // per_row), 8)
        tb = max(8, min(tb, max_block_b, _round_down(B, 8)))
        tb = min(tb, _round_up(pl.cdiv(B, 2), 8))   # >= 2 batch steps (megacore)
    b_steps = pl.cdiv(B, tb)

    footprint = (w_resident + 2 * tn * 4
                 + 2 * tb * In * x_bytes + 2 * tb * tn * o_bytes
                 + 4 * tb * (In + tn))
    vmem_limit = int(min(vmem_cap, max(2 * footprint, 32 * 1024 * 1024)))

    kernel = _make_kernel(scale_output_side=(tn < In))

    bytes_accessed = (B * In * x_bytes
                      + (1 if n_steps == 1 else b_steps) * In * Out * 2
                      + Out * 4
                      + B * Out * o_bytes)

    def build(resident_single_buffer: bool):
        extra = {}
        if n_steps == 1 and resident_single_buffer:
            # W/bias index_map is constant across the grid: one VMEM copy is
            # enough (default pipelining would allocate two — a 4096x4096 bf16
            # Hadamard x2 would be all of v7x's 64 MiB).
            extra = dict(pipeline_mode=pl.Buffered(1))
        w_spec = pl.BlockSpec((In, tn), lambda i, j: (0, j), **extra)
        bias_spec = pl.BlockSpec((1, tn), lambda i, j: (0, j), **extra)
        return pl.pallas_call(
            kernel,
            out_shape=jax.ShapeDtypeStruct((B, Out), out_dtype),
            grid=(b_steps, n_steps),            # N innermost; x block reused across j
            in_specs=[
                pl.BlockSpec((tb, In), lambda i, j: (i, 0)),       # x tile (pipelined)
                w_spec,                                            # Hadamard slab
                bias_spec,                                         # bias slab
                pl.BlockSpec(memory_space=pltpu.MemorySpace.SMEM), # scale scalar
            ],
            out_specs=pl.BlockSpec((tb, tn), lambda i, j: (i, j)),
            compiler_params=pltpu.CompilerParams(
                # Both axes independent (no reduction); "parallel" lets the
                # runtime shard them across v7x's two TensorCores.
                dimension_semantics=("parallel", "parallel"),
                vmem_limit_bytes=vmem_limit,
            ),
            cost_estimate=pl.CostEstimate(
                flops=2 * B * In * Out,
                transcendentals=2 * B,
                bytes_accessed=bytes_accessed,
            ),
        )

    try:
        out = build(True)(x, w_t, bias2d, scale)
    except Exception:
        # Graceful fallback if this Pallas build rejects Buffered(1): default
        # double buffering of the resident W (correct, just 2x its VMEM).
        out = build(False)(x, w_t, bias2d, scale)
    return out


if __name__ == "__main__":
    # Small shapes consistent with the module's forward (batch, input_size).
    batch = 8
    input_size = 32
    output_size = 16

    # Deterministic parameter init (mirrors HadamardProj.__init__).
    sz = 2 ** int(math.ceil(math.log(max(input_size, output_size), 2)))
    proj_full = _hadamard(sz)                                # (sz, sz), +/-1
    w = jnp.asarray(proj_full[:output_size, :input_size])    # (Out, In)

    init_scale = 1.0 / math.sqrt(output_size)
    scale = jnp.array([init_scale], dtype=jnp.float32)

    key = jax.random.PRNGKey(0)
    kx, kb = jax.random.split(key)
    bias = jax.random.uniform(kb, (output_size,), dtype=jnp.float32,
                              minval=-init_scale, maxval=init_scale)
    x = jax.random.normal(kx, (batch, input_size), dtype=jnp.float32)

    out = hadamard_proj(x, w, scale, bias)
    out = jax.block_until_ready(out)

    # Pure-JAX f32 reference. The kernel uses bf16 MXU operands and the EUP
    # approx reciprocal, so tolerance is relaxed accordingly.
    xn = x / (jnp.linalg.norm(x, axis=-1, keepdims=True) + 1e-8)
    ref = -scale[0] * (xn @ w.T) + bias[None, :]
    assert out.shape == (batch, output_size)
    err = float(jnp.max(jnp.abs(out - ref)))
    assert jnp.allclose(out, ref, atol=3e-2, rtol=3e-2), err

    print("KERNEL_OK")
</pallas_src>

<mosaic_0001>
module attributes {stable_mosaic.version = 11 : i64} {
  func.func @kernel(%arg0: i32, %arg1: i32, %arg2: memref<8x32xf32, #tpu.memory_space<vmem>>, %arg3: memref<32x16xbf16, #tpu.memory_space<vmem>>, %arg4: memref<1x16xf32, #tpu.memory_space<vmem>>, %arg5: memref<1xf32, #tpu.memory_space<smem>>, %arg6: memref<8x16xf32, #tpu.memory_space<vmem>>) attributes {dimension_semantics = [#tpu.dimension_semantics<parallel>, #tpu.dimension_semantics<parallel>], iteration_bounds = array<i64: 1, 1>, scalar_prefetch = 0 : i64, scratch_operands = 0 : i64, tpu.core_type = #tpu.core_type<tc>, window_params = [{transform_indices = @transform_0, window_bounds = array<i64: 8, 32>}, {pipeline_mode = #tpu.pipeline_mode<synchronous>, transform_indices = @transform_1, window_bounds = array<i64: 32, 16>}, {pipeline_mode = #tpu.pipeline_mode<synchronous>, transform_indices = @transform_2, window_bounds = array<i64: 1, 16>}, {transform_indices = @transform_3, window_bounds = array<i64: 1>}, {transform_indices = @transform_4, window_bounds = array<i64: 8, 16>}]} {
    %c0 = arith.constant 0 : index
    %c0_0 = arith.constant 0 : index
    %0 = vector.load %arg2[%c0, %c0_0] : memref<8x32xf32, #tpu.memory_space<vmem>>, vector<8x32xf32>
    %1 = arith.mulf %0, %0 : vector<8x32xf32>
    %cst = arith.constant dense<0.000000e+00> : vector<8xf32>
    %2 = vector.multi_reduction <add>, %1, %cst [1] : vector<8x32xf32> to vector<8xf32>
    %3 = vector.shape_cast %2 : vector<8xf32> to vector<8x1xf32>
    %4 = math.sqrt %3 : vector<8x1xf32>
    %cst_1 = arith.constant 9.99999993E-9 : f32
    %5 = vector.broadcast %cst_1 : f32 to vector<8x1xf32>
    %6 = arith.addf %4, %5 : vector<8x1xf32>
    %7 = tpu.reciprocal %6 {approx = true} : vector<8x1xf32> -> vector<8x1xf32>
    %c0_2 = arith.constant 0 : index
    %8 = memref.load %arg5[%c0_2] : memref<1xf32, #tpu.memory_space<smem>>
    %cst_3 = arith.constant 0.000000e+00 : f32
    %9 = arith.subf %cst_3, %8 : f32
    %10 = vector.broadcast %9 : f32 to vector<8x1xf32>
    %11 = arith.mulf %7, %10 : vector<8x1xf32>
    %12 = arith.truncf %0 : vector<8x32xf32> to vector<8x32xbf16>
    %c0_4 = arith.constant 0 : index
    %c0_5 = arith.constant 0 : index
    %13 = vector.load %arg3[%c0_4, %c0_5] : memref<32x16xbf16, #tpu.memory_space<vmem>>, vector<32x16xbf16>
    %cst_6 = arith.constant dense<0.000000e+00> : vector<8x16xf32>
    %14 = tpu.matmul %12, %13, %cst_6 {dimension_numbers = #tpu.dot_dimension_numbers<[1], [0], [0], [1], [0, 0, 1, 1], [], []>} : vector<8x32xbf16>, vector<32x16xbf16>, vector<8x16xf32> -> vector<8x16xf32>
    %15 = vector.broadcast %11 : vector<8x1xf32> to vector<8x16xf32>
    %16 = arith.mulf %14, %15 : vector<8x16xf32>
    %c0_7 = arith.constant 0 : index
    %c0_8 = arith.constant 0 : index
    %17 = vector.load %arg4[%c0_7, %c0_8] : memref<1x16xf32, #tpu.memory_space<vmem>>, vector<1x16xf32>
    %18 = vector.broadcast %17 : vector<1x16xf32> to vector<8x16xf32>
    %19 = arith.addf %16, %18 : vector<8x16xf32>
    %c0_9 = arith.constant 0 : index
    %c0_10 = arith.constant 0 : index
    %20 = vector.load %arg6[%c0_9, %c0_10] : memref<8x16xf32, #tpu.memory_space<vmem>>, vector<8x16xf32>
    tpu.vector_store %arg6[%c0_9, %c0_10], %19 {strides = array<i32>} : memref<8x16xf32, #tpu.memory_space<vmem>>, vector<8x16xf32>,
    return
  }
  func.func @transform_0(%arg0: i32, %arg1: i32) -> (i32, i32) {
    %c0_i32 = arith.constant 0 : i32
    %c0_i32_0 = arith.constant 0 : i32
    return %arg0, %c0_i32 : i32, i32
  }
  func.func @transform_1(%arg0: i32, %arg1: i32) -> (i32, i32) {
    %c0_i32 = arith.constant 0 : i32
    %c0_i32_0 = arith.constant 0 : i32
    return %c0_i32, %arg1 : i32, i32
  }
  func.func @transform_2(%arg0: i32, %arg1: i32) -> (i32, i32) {
    %c0_i32 = arith.constant 0 : i32
    %c0_i32_0 = arith.constant 0 : i32
    return %c0_i32, %arg1 : i32, i32
  }
  func.func @transform_3(%arg0: i32, %arg1: i32) -> i32 {
    %c0_i32 = arith.constant 0 : i32
    %c0_i32_0 = arith.constant 0 : i32
    return %c0_i32 : i32
  }
  func.func @transform_4(%arg0: i32, %arg1: i32) -> (i32, i32) {
    %c0_i32 = arith.constant 0 : i32
    return %arg0, %arg1 : i32, i32
  }
}

module attributes {stable_mosaic.version = 11 : i64} {
  func.func @kernel(%arg0: i32, %arg1: i32, %arg2: memref<8x32xf32, #tpu.memory_space<vmem>>, %arg3: memref<32x16xbf16, #tpu.memory_space<vmem>>, %arg4: memref<1x16xf32, #tpu.memory_space<vmem>>, %arg5: memref<1xf32, #tpu.memory_space<smem>>, %arg6: memref<8x16xf32, #tpu.memory_space<vmem>>) attributes {dimension_semantics = [#tpu.dimension_semantics<parallel>, #tpu.dimension_semantics<parallel>], iteration_bounds = array<i64: 1, 1>, scalar_prefetch = 0 : i64, scratch_operands = 0 : i64, tpu.core_type = #tpu.core_type<tc>, window_params = [{transform_indices = @transform_0, window_bounds = array<i64: 8, 32>}, {transform_indices = @transform_1, window_bounds = array<i64: 32, 16>}, {transform_indices = @transform_2, window_bounds = array<i64: 1, 16>}, {transform_indices = @transform_3, window_bounds = array<i64: 1>}, {transform_indices = @transform_4, window_bounds = array<i64: 8, 16>}]} {
    %c0 = arith.constant 0 : index
    %c0_0 = arith.constant 0 : index
    %0 = vector.load %arg2[%c0, %c0_0] : memref<8x32xf32, #tpu.memory_space<vmem>>, vector<8x32xf32>
    %1 = arith.mulf %0, %0 : vector<8x32xf32>
    %cst = arith.constant dense<0.000000e+00> : vector<8xf32>
    %2 = vector.multi_reduction <add>, %1, %cst [1] : vector<8x32xf32> to vector<8xf32>
    %3 = vector.shape_cast %2 : vector<8xf32> to vector<8x1xf32>
    %4 = math.sqrt %3 : vector<8x1xf32>
    %cst_1 = arith.constant 9.99999993E-9 : f32
    %5 = vector.broadcast %cst_1 : f32 to vector<8x1xf32>
    %6 = arith.addf %4, %5 : vector<8x1xf32>
    %7 = tpu.reciprocal %6 {approx = true} : vector<8x1xf32> -> vector<8x1xf32>
    %c0_2 = arith.constant 0 : index
    %8 = memref.load %arg5[%c0_2] : memref<1xf32, #tpu.memory_space<smem>>
    %cst_3 = arith.constant 0.000000e+00 : f32
    %9 = arith.subf %cst_3, %8 : f32
    %10 = vector.broadcast %9 : f32 to vector<8x1xf32>
    %11 = arith.mulf %7, %10 : vector<8x1xf32>
    %12 = arith.truncf %0 : vector<8x32xf32> to vector<8x32xbf16>
    %c0_4 = arith.constant 0 : index
    %c0_5 = arith.constant 0 : index
    %13 = vector.load %arg3[%c0_4, %c0_5] : memref<32x16xbf16, #tpu.memory_space<vmem>>, vector<32x16xbf16>
    %cst_6 = arith.constant dense<0.000000e+00> : vector<8x16xf32>
    %14 = tpu.matmul %12, %13, %cst_6 {dimension_numbers = #tpu.dot_dimension_numbers<[1], [0], [0], [1], [0, 0, 1, 1], [], []>} : vector<8x32xbf16>, vector<32x16xbf16>, vector<8x16xf32> -> vector<8x16xf32>
    %15 = vector.broadcast %11 : vector<8x1xf32> to vector<8x16xf32>
    %16 = arith.mulf %14, %15 : vector<8x16xf32>
    %c0_7 = arith.constant 0 : index
    %c0_8 = arith.constant 0 : index
    %17 = vector.load %arg4[%c0_7, %c0_8] : memref<1x16xf32, #tpu.memory_space<vmem>>, vector<1x16xf32>
    %18 = vector.broadcast %17 : vector<1x16xf32> to vector<8x16xf32>
    %19 = arith.addf %16, %18 : vector<8x16xf32>
    %c0_9 = arith.constant 0 : index
    %c0_10 = arith.constant 0 : index
    %20 = vector.load %arg6[%c0_9, %c0_10] : memref<8x16xf32, #tpu.memory_space<vmem>>, vector<8x16xf32>
    tpu.vector_store %arg6[%c0_9, %c0_10], %19 {strides = array<i32>} : memref<8x16xf32, #tpu.memory_space<vmem>>, vector<8x16xf32>,
    return
  }
  func.func @transform_0(%arg0: i32, %arg1: i32) -> (i32, i32) {
    %c0_i32 = arith.constant 0 : i32
    %c0_i32_0 = arith.constant 0 : i32
    return %arg0, %c0_i32 : i32, i32
  }
  func.func @transform_1(%arg0: i32, %arg1: i32) -> (i32, i32) {
    %c0_i32 = arith.constant 0 : i32
    %c0_i32_0 = arith.constant 0 : i32
    return %c0_i32, %arg1 : i32, i32
  }
  func.func @transform_2(%arg0: i32, %arg1: i32) -> (i32, i32) {
    %c0_i32 = arith.constant 0 : i32
    %c0_i32_0 = arith.constant 0 : i32
    return %c0_i32, %arg1 : i32, i32
  }
  func.func @transform_3(%arg0: i32, %arg1: i32) -> i32 {
    %c0_i32 = arith.constant 0 : i32
    %c0_i32_0 = arith.constant 0 : i32
    return %c0_i32 : i32
  }
  func.func @transform_4(%arg0: i32, %arg1: i32) -> (i32, i32) {
    %c0_i32 = arith.constant 0 : i32
    return %arg0, %arg1 : i32, i32
  }
}

</mosaic_0001>

<llo_original>
// kernel: tpu_custom_call.1
$region0: #{tpu_custom_call.1}
  #allocation0 [shape = 'u32[]', space=smem, size = 0x4, offset = 0x4, fixed_abs, tag = 'smem constant byte address 0x4 - core index']
  #allocation1 [shape = 'u32[144,128]{1,0:T(1,128)}', space=vmem, size = 0x12000, scoped, tag = 'internal scratch']
  #allocation2 [shape = 'f32[1]{0:T(128)S(6)}', space=smem, size = 0x200, scoped, tag = 'scoped memory for tpu_custom_call.1']
  %s0 = inlined_call_operand.vmem [shape: f32[8,32], index: 0, kind: input, shape index: {}]
  %s1 = inlined_call_operand.vmem [shape: bf16[32,16], index: 1, kind: input, shape index: {}]
  %s2 = inlined_call_operand.vmem [shape: f32[1,16], index: 2, kind: input, shape index: {}]
  %s3 = inlined_call_operand.<no memory space> [shape: f32[1], index: 3, kind: input, shape index: {}]
  %s4 = inlined_call_operand.hbm [shape: f32[8,16], index: 4, kind: output, shape index: {}]
  %s5 = sld [smem:[#allocation0]]
  $region26: #{tpu_custom_call.1} parent=0
    _
  %s7 = ssub.s32 1, %s5
  %s8 = scalar_select 0, %s7, %s5
  %9 = sst [smem:[#allocation2]] %s3
  $region1: #{tpu_custom_call.1} parent=0
    #allocation3 [shape = 'u8[4096]{0}', space=vmem, size = 0x1000, scoped, tag = 'output window, operand 0, single buffered']
    #allocation4 [shape = 's32[1]{0}', space=sflag, size = 0x4, scoped, tag = 'scoped memory for tpu_custom_call.1']
    %10 = vsyncpa [#allocation4], 0
    // Predicated region
    $region2: #{tpu_custom_call.1} parent=1 // pred_check
      _
    $region3: #{tpu_custom_call.1} parent=1 // pred_check_branch
      %12 = sbr.rel (0) target = $region5
    $region4: #{tpu_custom_call.1} parent=1 // pred_region
      _
    $region5: #{tpu_custom_call.1} parent=1 // pred_fallthru
      _
    // Predicated region
    $region6: #{tpu_custom_call.1} parent=1 // pred_check
      _
    $region7: #{tpu_custom_call.1} parent=1 // pred_check_branch
      %14 = sbr.rel (0) target = $region9
    $region8: #{tpu_custom_call.1} parent=1 // pred_region
      _
    $region9: #{tpu_custom_call.1} parent=1 // pred_fallthru
      _
    // Predicated region
    $region10: #{tpu_custom_call.1} parent=1 // pred_check
      _
    $region11: #{tpu_custom_call.1} parent=1 // pred_check_branch
      %16 = sbr.rel (0) target = $region13
    $region12: #{tpu_custom_call.1} parent=1 // pred_region
      _
    $region13: #{tpu_custom_call.1} parent=1 // pred_fallthru
      _
    // Predicated region
    $region14: #{tpu_custom_call.1} parent=1 // pred_check
      _
    $region15: #{tpu_custom_call.1} parent=1 // pred_check_branch
      %18 = sbr.rel (0) target = $region17
    $region16: #{tpu_custom_call.1} parent=1 // pred_region
      _
    $region17: #{tpu_custom_call.1} parent=1 // pred_fallthru
      _
    %v20 = vld [vmem:[%s0] sm:$0xff]
    %v21 = vmul.f32 %v20, %v20
    %vm22 = vcmask 261120
    %v23 = vsel %vm22, %v21, 0.0
    %24 = vadd.xlane.f32.xlu0 %v23
    %v25 = vpop.xlane.xlu0 %24
    %v26 = vrsqrt.pop %v25
    %v27 = vmul.f32 %v25, %v26
    %vm28 = vcmp.eq.f32.partialorder %v25, inf
    %v29 = vsel %vm28, %v25, %v27
    %vm30 = vcmp.eq.f32.partialorder %v25, 0.0
    %v31 = vand.u32 %v25, 2147483648
    %v32 = vsel %vm30, %v31, %v29
    %v33 = vadd.f32 %v32, 1e-08
    %v34 = vrcp.pop %v33
    %s35 = sld [smem:[#allocation2]]
    %s36 = ssub.f32 0.0, %s35
    %v37 = vstv %s36
    %v38 = vmul.f32 %v34, %v37
    %v39 = vpack.c.bf16 %v20, %v20
    %v40 = vld [vmem:[%s1] sm:$0xf]
    %v41 = vld [vmem:[%s1 + $0x4] sm:$0xf]
    %v42 = vld [vmem:[%s1 + $0x8] sm:$0xf]
    %v43 = vld [vmem:[%s1 + $0xc] sm:$0xf]
    %v48 = vunpack.c.l.b16 %v40
    %v49 = vunpack.c.l.b16 %v41
    %v50 = vunpack.c.l.b16 %v42
    %v51 = vunpack.c.l.b16 %v43
    %v52 = vpack.c.b16 %v49, %v48
    %v53 = vpack.c.b16 %v51, %v50
    %v57 = vsel %vm22, %v39, 0
    %59 = vmatprep.subr.bf16.mxu0 0
    %60 = vmatpush1.bf16.msra.mxu0 %v52
    %61 = vmatprep.subr.bf16.mxu0 0
    %62 = vmatpush1.bf16.msra.mxu0 %v53
    %63 = vmatprep.subr.bf16.mxu0 0
    %64 = vmatpush1.bf16.msra.mxu0 0
    %65 = vmatprep.subr.bf16.mxu0 0
    %66 = vmatpush1.bf16.msra.mxu0 0
    %67 = vmatprep.subr.bf16.mxu0 0
    %68 = vmatpush1.bf16.msra.mxu0 0
    %69 = vmatprep.subr.bf16.mxu0 0
    %70 = vmatpush1.bf16.msra.mxu0 0
    %71 = vmatprep.subr.bf16.mxu0 0
    %72 = vmatpush1.bf16.msra.mxu0 0
    %73 = vmatprep.subr.bf16.mxu0 0
    %74 = vmatpush1.bf16.msra.mxu0 0
    %75 = vmatprep.subr.bf16.mxu0 0
    %76 = vmatpush1.bf16.msra.mxu0 0
    %77 = vmatprep.subr.bf16.mxu0 0
    %78 = vmatpush1.bf16.msra.mxu0 0
    %79 = vmatprep.subr.bf16.mxu0 0
    %80 = vmatpush1.bf16.msra.mxu0 0
    %81 = vmatprep.subr.bf16.mxu0 0
    %82 = vmatpush1.bf16.msra.mxu0 0
    %83 = vmatprep.subr.bf16.mxu0 0
    %84 = vmatpush1.bf16.msra.mxu0 0
    %85 = vmatprep.subr.bf16.mxu0 0
    %86 = vmatpush1.bf16.msra.mxu0 0
    %87 = vmatprep.subr.bf16.mxu0 0
    %88 = vmatpush1.bf16.msra.mxu0 0
    %89 = vmatprep.subr.bf16.mxu0 0
    %90 = vmatpush1.bf16.msra.mxu0 0
    %91 = vmatprep.mubr.bf16.mxu0 0
    %92 = vmatmul.mubr.bf16.gmra.mrb[0].mxu0 %v57
    %v93 = vpop.f32.mrb[0].mxu0
    %v94 = vadd.f32 0.0, %v93
    %v95 = vpop.f32.mrb[0].mxu0
    %v96 = vpop.f32.mrb[0].mxu0
    %v97 = vpop.f32.mrb[0].mxu0
    %98 = vdwg.mxu0
    %v99 = vmul.f32 %v94, %v38
    %v100 = vld [vmem:[%s2] sm:$0x1]
    %v102 = vlaneseq
    %v103 = vshrl.u32 %v102, 7
    %v104 = vsub.s32 0, %v103
    %v105 = vrot.slane %v100, %v104
    %v107 = vadd.f32 %v99, %v105
    %vm108 = vcmask 130048
    %109 = vst.msk [vmem:[#allocation3] sm:$0xff] %vm108, %v107
    // Predicated region
    $region18: #{tpu_custom_call.1} parent=1 // pred_check
      _
    $region19: #{tpu_custom_call.1} parent=1 // pred_check_branch
      %111 = sbr.rel (0) target = $region21
    $region20: #{tpu_custom_call.1} parent=1 // pred_region
      %s113 = ssub.s32 128, 128
      %114 = vsyncadd [#allocation4], %s113
      %s116 = sshll.u32 [#allocation3], 4
      %s117 = int_to_ptr.vmem [resolvable:$true] %s116
      %119 = dma.vmem_to_hbm [thread:$0]  %s117, 128, %s4, [#allocation4]
    $region21: #{tpu_custom_call.1} parent=1 // pred_fallthru
      _
    // Predicated region
    $region22: #{tpu_custom_call.1} parent=1 // pred_check
      _
    $region23: #{tpu_custom_call.1} parent=1 // pred_check_branch
      %121 = sbr.rel (0) target = $region25
    $region24: #{tpu_custom_call.1} parent=1 // pred_region
      %122 = dma.done [#allocation4], 128
    $region25: #{tpu_custom_call.1} parent=1 // pred_fallthru
      _
    %123 = vsyncpa [#allocation4], 1

// kernel: tpu_custom_call.1
$region0: #{tpu_custom_call.1}
  #allocation0 [shape = 'u32[]', space=smem, size = 0x4, offset = 0x4, fixed_abs, tag = 'smem constant byte address 0x4 - core index']
  #allocation1 [shape = 'u32[144,128]{1,0:T(1,128)}', space=vmem, size = 0x12000, scoped, tag = 'internal scratch']
  #allocation2 [shape = 'f32[1]{0:T(128)S(6)}', space=smem, size = 0x200, scoped, tag = 'scoped memory for tpu_custom_call.1']
  %s0 = inlined_call_operand.vmem [shape: f32[8,32], index: 0, kind: input, shape index: {}]
  %s1 = inlined_call_operand.vmem [shape: bf16[32,16], index: 1, kind: input, shape index: {}]
  %s2 = inlined_call_operand.vmem [shape: f32[1,16], index: 2, kind: input, shape index: {}]
  %s3 = inlined_call_operand.<no memory space> [shape: f32[1], index: 3, kind: input, shape index: {}]
  %s4 = inlined_call_operand.hbm [shape: f32[8,16], index: 4, kind: output, shape index: {}]
  %s5 = sld [smem:[#allocation0]]
  $region26: #{tpu_custom_call.1} parent=0
    _
  %s7 = ssub.s32 1, %s5
  %s8 = scalar_select 0, %s7, %s5
  %9 = sst [smem:[#allocation2]] %s3
  $region1: #{tpu_custom_call.1} parent=0
    #allocation3 [shape = 'u8[4096]{0}', space=vmem, size = 0x1000, scoped, tag = 'output window, operand 0, single buffered']
    #allocation4 [shape = 's32[1]{0}', space=sflag, size = 0x4, scoped, tag = 'scoped memory for tpu_custom_call.1']
    %10 = vsyncpa [#allocation4], 0
    // Predicated region
    $region2: #{tpu_custom_call.1} parent=1 // pred_check
      _
    $region3: #{tpu_custom_call.1} parent=1 // pred_check_branch
      %12 = sbr.rel (0) target = $region5
    $region4: #{tpu_custom_call.1} parent=1 // pred_region
      _
    $region5: #{tpu_custom_call.1} parent=1 // pred_fallthru
      _
    // Predicated region
    $region6: #{tpu_custom_call.1} parent=1 // pred_check
      _
    $region7: #{tpu_custom_call.1} parent=1 // pred_check_branch
      %14 = sbr.rel (0) target = $region9
    $region8: #{tpu_custom_call.1} parent=1 // pred_region
      _
    $region9: #{tpu_custom_call.1} parent=1 // pred_fallthru
      _
    // Predicated region
    $region10: #{tpu_custom_call.1} parent=1 // pred_check
      _
    $region11: #{tpu_custom_call.1} parent=1 // pred_check_branch
      %16 = sbr.rel (0) target = $region13
    $region12: #{tpu_custom_call.1} parent=1 // pred_region
      _
    $region13: #{tpu_custom_call.1} parent=1 // pred_fallthru
      _
    // Predicated region
    $region14: #{tpu_custom_call.1} parent=1 // pred_check
      _
    $region15: #{tpu_custom_call.1} parent=1 // pred_check_branch
      %18 = sbr.rel (0) target = $region17
    $region16: #{tpu_custom_call.1} parent=1 // pred_region
      _
    $region17: #{tpu_custom_call.1} parent=1 // pred_fallthru
      _
    %v20 = vld [vmem:[%s0] sm:$0xff]
    %v21 = vmul.f32 %v20, %v20
    %vm22 = vcmask 261120
    %v23 = vsel %vm22, %v21, 0.0
    %24 = vadd.xlane.f32.xlu0 %v23
    %v25 = vpop.xlane.xlu0 %24
    %v26 = vrsqrt.pop %v25
    %v27 = vmul.f32 %v25, %v26
    %vm28 = vcmp.eq.f32.partialorder %v25, inf
    %v29 = vsel %vm28, %v25, %v27
    %vm30 = vcmp.eq.f32.partialorder %v25, 0.0
    %v31 = vand.u32 %v25, 2147483648
    %v32 = vsel %vm30, %v31, %v29
    %v33 = vadd.f32 %v32, 1e-08
    %v34 = vrcp.pop %v33
    %s35 = sld [smem:[#allocation2]]
    %s36 = ssub.f32 0.0, %s35
    %v37 = vstv %s36
    %v38 = vmul.f32 %v34, %v37
    %v39 = vpack.c.bf16 %v20, %v20
    %v40 = vld [vmem:[%s1] sm:$0xf]
    %v41 = vld [vmem:[%s1 + $0x4] sm:$0xf]
    %v42 = vld [vmem:[%s1 + $0x8] sm:$0xf]
    %v43 = vld [vmem:[%s1 + $0xc] sm:$0xf]
    %v48 = vunpack.c.l.b16 %v40
    %v49 = vunpack.c.l.b16 %v41
    %v50 = vunpack.c.l.b16 %v42
    %v51 = vunpack.c.l.b16 %v43
    %v52 = vpack.c.b16 %v49, %v48
    %v53 = vpack.c.b16 %v51, %v50
    %v57 = vsel %vm22, %v39, 0
    %59 = vmatprep.subr.bf16.mxu0 0
    %60 = vmatpush1.bf16.msra.mxu0 %v52
    %61 = vmatprep.subr.bf16.mxu0 0
    %62 = vmatpush1.bf16.msra.mxu0 %v53
    %63 = vmatprep.subr.bf16.mxu0 0
    %64 = vmatpush1.bf16.msra.mxu0 0
    %65 = vmatprep.subr.bf16.mxu0 0
    %66 = vmatpush1.bf16.msra.mxu0 0
    %67 = vmatprep.subr.bf16.mxu0 0
    %68 = vmatpush1.bf16.msra.mxu0 0
    %69 = vmatprep.subr.bf16.mxu0 0
    %70 = vmatpush1.bf16.msra.mxu0 0
    %71 = vmatprep.subr.bf16.mxu0 0
    %72 = vmatpush1.bf16.msra.mxu0 0
    %73 = vmatprep.subr.bf16.mxu0 0
    %74 = vmatpush1.bf16.msra.mxu0 0
    %75 = vmatprep.subr.bf16.mxu0 0
    %76 = vmatpush1.bf16.msra.mxu0 0
    %77 = vmatprep.subr.bf16.mxu0 0
    %78 = vmatpush1.bf16.msra.mxu0 0
    %79 = vmatprep.subr.bf16.mxu0 0
    %80 = vmatpush1.bf16.msra.mxu0 0
    %81 = vmatprep.subr.bf16.mxu0 0
    %82 = vmatpush1.bf16.msra.mxu0 0
    %83 = vmatprep.subr.bf16.mxu0 0
    %84 = vmatpush1.bf16.msra.mxu0 0
    %85 = vmatprep.subr.bf16.mxu0 0
    %86 = vmatpush1.bf16.msra.mxu0 0
    %87 = vmatprep.subr.bf16.mxu0 0
    %88 = vmatpush1.bf16.msra.mxu0 0
    %89 = vmatprep.subr.bf16.mxu0 0
    %90 = vmatpush1.bf16.msra.mxu0 0
    %91 = vmatprep.mubr.bf16.mxu0 0
    %92 = vmatmul.mubr.bf16.gmra.mrb[0].mxu0 %v57
    %v93 = vpop.f32.mrb[0].mxu0
    %v94 = vadd.f32 0.0, %v93
    %v95 = vpop.f32.mrb[0].mxu0
    %v96 = vpop.f32.mrb[0].mxu0
    %v97 = vpop.f32.mrb[0].mxu0
    %98 = vdwg.mxu0
    %v99 = vmul.f32 %v94, %v38
    %v100 = vld [vmem:[%s2] sm:$0x1]
    %v102 = vlaneseq
    %v103 = vshrl.u32 %v102, 7
    %v104 = vsub.s32 0, %v103
    %v105 = vrot.slane %v100, %v104
    %v107 = vadd.f32 %v99, %v105
    %vm108 = vcmask 130048
    %109 = vst.msk [vmem:[#allocation3] sm:$0xff] %vm108, %v107
    // Predicated region
    $region18: #{tpu_custom_call.1} parent=1 // pred_check
      _
    $region19: #{tpu_custom_call.1} parent=1 // pred_check_branch
      %111 = sbr.rel (0) target = $region21
    $region20: #{tpu_custom_call.1} parent=1 // pred_region
      %s113 = ssub.s32 128, 128
      %114 = vsyncadd [#allocation4], %s113
      %s116 = sshll.u32 [#allocation3], 4
      %s117 = int_to_ptr.vmem [resolvable:$true] %s116
      %119 = dma.vmem_to_hbm [thread:$0]  %s117, 128, %s4, [#allocation4]
    $region21: #{tpu_custom_call.1} parent=1 // pred_fallthru
      _
    // Predicated region
    $region22: #{tpu_custom_call.1} parent=1 // pred_check
      _
    $region23: #{tpu_custom_call.1} parent=1 // pred_check_branch
      %121 = sbr.rel (0) target = $region25
    $region24: #{tpu_custom_call.1} parent=1 // pred_region
      %122 = dma.done [#allocation4], 128
    $region25: #{tpu_custom_call.1} parent=1 // pred_fallthru
      _
    %123 = vsyncpa [#allocation4], 1

</llo_original>
